<compile_context>
chip_gen: v6e
topology: v6e:2x2x1
jax: 0.10.0
libtpu: 0.0.40
codegen_flags: <defaults>
</compile_context>

<pallas_src>
import jax
import jax.numpy as jnp
import numpy as np
from jax import lax
from jax.experimental import pallas as pl
from jax.experimental.pallas import tpu as pltpu


def _make_fire_kernel(H, W, S):
    HW = H * W

    def kernel(x_ref, wsqT_ref, off1_ref, wcomb_ref, offc_ref, mask_ref,
               out_ref, stk_ref):
        # ---- squeeze 1x1 conv + LIF spike (membrane starts at 0) ----
        # off1 = bias - threshold, already broadcast to (S, HW) host-side.
        sq = jnp.dot(wsqT_ref[...], x_ref[0],
                     preferred_element_type=jnp.float32) + off1_ref[...]
        spk1 = jnp.where(sq > 0, 1.0, 0.0)                       # (S, HW), exact 0/1

        # ---- stack the 9 spatial taps of spk1 into a (9S, HW) block ----
        # tap t = spk1 shifted by (dy, dx) along the flattened-spatial lane axis,
        # zeroed at image borders via precomputed masks (SAME padding).  S is a multiple of 8
        # for real fire modules, so each sublane-slice store below is tile-aligned.
        for ky in range(3):
            for kx in range(3):
                t = ky * 3 + kx
                dy, dx = ky - 1, kx - 1
                if dy == 0 and dx == 0:
                    tap = spk1                                   # center tap: no shift/mask
                else:
                    shift = (-(dy * W + dx)) % HW
                    tap = pltpu.roll(spk1, shift=shift, axis=1) * mask_ref[t]
                stk_ref[t * S:(t + 1) * S, :] = tap.astype(stk_ref.dtype)

        # ---- fused expand1x1 + expand3x3 + LIF spikes in ONE matmul ----
        # wcomb rows 0..E1-1 hold we1 (center-tap columns only); rows E1.. hold we3 taps.
        # offc = bias - threshold for the concatenated output channels.
        comb = jnp.dot(wcomb_ref[...], stk_ref[...],
                       preferred_element_type=jnp.float32) + offc_ref[...]
        out_ref[0] = jnp.where(comb > 0, 1.0, 0.0)               # (E1+E3, HW), lane-dense store

    return kernel


def fire_module_pallas(x_nchw, wsq, bsq, thr1, we1, be1, thr2, we3_hwio, be3, thr3,
                       *, use_bf16=False):
    """x_nchw: (N, Cin, H, W).  wsq: (Cin, S). we1: (S, E1). we3_hwio: (3, 3, S, E3)."""
    N, Cin, H, W = x_nchw.shape
    S = wsq.shape[1]
    E1 = we1.shape[1]
    E3 = we3_hwio.shape[3]
    HW = H * W
    Eo = E1 + E3
    cdt = jnp.bfloat16 if use_bf16 else jnp.float32   # fused expand-matmul operand dtype

    # ---------------- host-side layout plumbing (no activation transposes) ----------------
    x_rows = x_nchw.reshape(N, Cin, HW)                      # NCHW -> (N, C, HW), free reshape
    wsqT = wsq.T                                             # (S, Cin)

    # thresholds broadcast over the last NCHW dim W -> per flat column value thr[hw % W]
    thr1_row = jnp.tile(thr1, H)                             # (HW,)
    thr2_row = jnp.tile(thr2, H)
    thr3_row = jnp.tile(thr3, H)
    off1 = bsq[:, None] - thr1_row[None, :]                  # (S, HW)  = bias - thr
    offc = jnp.concatenate([be1[:, None] - thr2_row[None, :],
                            be3[:, None] - thr3_row[None, :]], axis=0)   # (Eo, HW)

    # combined expand weight: one (Eo, 9S) x (9S, HW) matmul yields [expand1x1; expand3x3]
    wcomb = jnp.zeros((Eo, 9 * S), jnp.float32)
    wcomb = wcomb.at[:E1, 4 * S:5 * S].set(we1.T)            # 1x1 path uses the center tap only
    for ky in range(3):
        for kx in range(3):
            t = ky * 3 + kx
            wcomb = wcomb.at[E1:, t * S:(t + 1) * S].set(we3_hwio[ky, kx].T)
    wcomb = wcomb.astype(cdt)

    # border-validity masks per tap (static given H, W), lane-dense (9, 1, HW)
    hh = jnp.arange(HW) // W
    ww = jnp.arange(HW) % W
    masks = jnp.stack(
        [(((hh + dy) >= 0) & ((hh + dy) < H) & ((ww + dx) >= 0) & ((ww + dx) < W))
         .astype(jnp.float32)
         for dy in (-1, 0, 1) for dx in (-1, 0, 1)]).reshape(9, 1, HW)

    kernel = _make_fire_kernel(H, W, S)

    # Advisory cost model for XLA's scheduler around the custom call.
    flops = N * (2 * S * Cin * HW + 2 * Eo * 9 * S * HW)
    bytes_accessed = (N * Cin * HW * 4 + N * Eo * HW * 4          # x in, spikes out
                      + S * Cin * 4 + S * HW * 4                  # squeeze weight + offset
                      + Eo * 9 * S * jnp.dtype(cdt).itemsize      # combined expand weight
                      + Eo * HW * 4 + 9 * HW * 4)                 # expand offset + masks
    cost = pl.CostEstimate(flops=flops, transcendentals=0, bytes_accessed=bytes_accessed)

    out_rows = pl.pallas_call(
        kernel,
        out_shape=jax.ShapeDtypeStruct((N, Eo, HW), jnp.float32),
        grid_spec=pltpu.PrefetchScalarGridSpec(
            num_scalar_prefetch=0,
            grid=(N,),
            in_specs=[
                pl.BlockSpec((1, Cin, HW), lambda n: (n, 0, 0)),       # x (per batch image)
                pl.BlockSpec((S, Cin), lambda n: (0, 0)),              # squeeze weight^T
                pl.BlockSpec((S, HW), lambda n: (0, 0)),               # bias - thr (squeeze)
                pl.BlockSpec((Eo, 9 * S), lambda n: (0, 0)),           # combined expand weight
                pl.BlockSpec((Eo, HW), lambda n: (0, 0)),              # bias - thr (expand)
                pl.BlockSpec((9, 1, HW), lambda n: (0, 0, 0)),         # tap validity masks
            ],
            out_specs=pl.BlockSpec((1, Eo, HW), lambda n: (n, 0, 0)),
            scratch_shapes=[pltpu.VMEM((9 * S, HW), cdt)],             # stacked taps
        ),
        compiler_params=pltpu.CompilerParams(dimension_semantics=("parallel",)),
        cost_estimate=cost,
    )(x_rows, wsqT, off1, wcomb, offc, masks)

    return out_rows.reshape(N, Eo, H, W)                      # already NCHW, free reshape


def fire_module_ref(x_nchw, wsq, bsq, thr1, we1, be1, thr2, we3_hwio, be3, thr3):
    """Pure-JAX reference mirroring the PyTorch forward."""
    x = jnp.transpose(x_nchw, (0, 2, 3, 1))                  # NHWC
    sq = jnp.einsum('nhwc,cs->nhws', x, wsq) + bsq
    spk1 = (sq - thr1[None, None, :, None] > 0).astype(jnp.float32)
    e1 = jnp.einsum('nhws,se->nhwe', spk1, we1) + be1
    spk2 = (e1 - thr2[None, None, :, None] > 0).astype(jnp.float32)
    e3 = lax.conv_general_dilated(spk1, we3_hwio, window_strides=(1, 1),
                                  padding='SAME',
                                  dimension_numbers=('NHWC', 'HWIO', 'NHWC')) + be3
    spk3 = (e3 - thr3[None, None, :, None] > 0).astype(jnp.float32)
    out = jnp.concatenate([spk2, spk3], axis=-1)
    return jnp.transpose(out, (0, 3, 1, 2))


if __name__ == "__main__":
    # Small shapes consistent with the module: beta_shape must equal W for the
    # (beta_shape,) threshold broadcast (like the default 14 for 14x14 feature maps).
    N, Cin, H, W = 2, 4, 16, 16
    S, E1, E3 = 8, 8, 8
    beta_shape = W

    key = jax.random.PRNGKey(0)
    ks = jax.random.split(key, 13)
    x = jax.random.normal(ks[0], (N, Cin, H, W), jnp.float32)

    # Deterministic synthetic parameters (3x3 conv weight in HWIO).
    wsq = jax.random.normal(ks[1], (Cin, S), jnp.float32) * 0.5
    bsq = jax.random.normal(ks[2], (S,), jnp.float32) * 0.1
    we1 = jax.random.normal(ks[3], (S, E1), jnp.float32) * 0.5
    be1 = jax.random.normal(ks[4], (E1,), jnp.float32) * 0.1
    we3 = jax.random.normal(ks[5], (3, 3, S, E3), jnp.float32) * 0.2
    be3 = jax.random.normal(ks[6], (E3,), jnp.float32) * 0.1
    thr1 = jax.random.uniform(ks[7], (beta_shape,), jnp.float32, 0.05, 1.0)
    thr2 = jax.random.uniform(ks[8], (beta_shape,), jnp.float32, 0.05, 1.0)
    thr3 = jax.random.uniform(ks[9], (beta_shape,), jnp.float32, 0.05, 1.0)
    beta1 = jax.random.uniform(ks[10], (beta_shape,), jnp.float32)  # unused (mem starts at 0)
    beta2 = jax.random.uniform(ks[11], (beta_shape,), jnp.float32)  # unused
    beta3 = jax.random.uniform(ks[12], (beta_shape,), jnp.float32)  # unused

    ref = fire_module_ref(x, wsq, bsq, thr1, we1, be1, thr2, we3, be3, thr3)
    ref = jax.block_until_ready(ref)

    # f32 operands: exact match with the reference forward.
    out = fire_module_pallas(x, wsq, bsq, thr1, we1, be1, thr2, we3, be3, thr3)
    out = jax.block_until_ready(out)
    assert out.shape == (N, E1 + E3, H, W), out.shape
    np.testing.assert_allclose(np.asarray(out), np.asarray(ref), atol=1e-5)

    # bf16 operands for the fused expand matmul (recommended on v6e/v7x): spikes are exact in
    # bf16, only weight rounding can flip membrane values sitting right at the threshold, so
    # check a loose agreement rate rather than exact equality.
    out_bf16 = fire_module_pallas(x, wsq, bsq, thr1, we1, be1, thr2, we3, be3, thr3,
                                  use_bf16=True)
    out_bf16 = jax.block_until_ready(out_bf16)
    assert out_bf16.shape == (N, E1 + E3, H, W), out_bf16.shape
    agree = float(np.mean(np.asarray(out_bf16) == np.asarray(ref)))
    assert agree > 0.95, agree

    print("KERNEL_OK")
</pallas_src>

<mosaic_0001>
module attributes {stable_mosaic.version = 11 : i64} {
  func.func @kernel(%arg0: i32, %arg1: memref<1x4x256xf32, #tpu.memory_space<vmem>>, %arg2: memref<8x4xf32, #tpu.memory_space<vmem>>, %arg3: memref<8x256xf32, #tpu.memory_space<vmem>>, %arg4: memref<16x72xf32, #tpu.memory_space<vmem>>, %arg5: memref<16x256xf32, #tpu.memory_space<vmem>>, %arg6: memref<9x1x256xf32, #tpu.memory_space<vmem>>, %arg7: memref<1x16x256xf32, #tpu.memory_space<vmem>>, %arg8: memref<72x256xf32, #tpu.memory_space<vmem>>) attributes {dimension_semantics = [#tpu.dimension_semantics<parallel>], iteration_bounds = array<i64: 2>, scalar_prefetch = 0 : i64, scratch_operands = 1 : i64, tpu.core_type = #tpu.core_type<tc>, window_params = [{transform_indices = @transform_0, window_bounds = array<i64: 1, 4, 256>}, {pipeline_mode = #tpu.pipeline_mode<synchronous>, transform_indices = @transform_1, window_bounds = array<i64: 8, 4>}, {pipeline_mode = #tpu.pipeline_mode<synchronous>, transform_indices = @transform_2, window_bounds = array<i64: 8, 256>}, {pipeline_mode = #tpu.pipeline_mode<synchronous>, transform_indices = @transform_3, window_bounds = array<i64: 16, 72>}, {pipeline_mode = #tpu.pipeline_mode<synchronous>, transform_indices = @transform_4, window_bounds = array<i64: 16, 256>}, {pipeline_mode = #tpu.pipeline_mode<synchronous>, transform_indices = @transform_5, window_bounds = array<i64: 9, 1, 256>}, {transform_indices = @transform_6, window_bounds = array<i64: 1, 16, 256>}]} {
    %c0 = arith.constant 0 : index
    %c0_0 = arith.constant 0 : index
    %0 = vector.load %arg2[%c0, %c0_0] : memref<8x4xf32, #tpu.memory_space<vmem>>, vector<8x4xf32>
    %c0_1 = arith.constant 0 : index
    %c0_2 = arith.constant 0 : index
    %c0_3 = arith.constant 0 : index
    %1 = vector.load %arg1[%c0_1, %c0_2, %c0_3] : memref<1x4x256xf32, #tpu.memory_space<vmem>>, vector<1x4x256xf32>
    %2 = vector.shape_cast %1 : vector<1x4x256xf32> to vector<4x256xf32>
    %cst = arith.constant dense<0.000000e+00> : vector<8x256xf32>
    %3 = tpu.matmul %0, %2, %cst {dimension_numbers = #tpu.dot_dimension_numbers<[1], [0], [0], [1], [0, 0, 1, 1], [], []>} : vector<8x4xf32>, vector<4x256xf32>, vector<8x256xf32> -> vector<8x256xf32>
    %c0_4 = arith.constant 0 : index
    %c0_5 = arith.constant 0 : index
    %4 = vector.load %arg3[%c0_4, %c0_5] : memref<8x256xf32, #tpu.memory_space<vmem>>, vector<8x256xf32>
    %5 = arith.addf %3, %4 : vector<8x256xf32>
    %cst_6 = arith.constant 0.000000e+00 : f32
    %6 = vector.broadcast %cst_6 : f32 to vector<8x256xf32>
    %7 = arith.cmpf ogt, %5, %6 : vector<8x256xf32>
    %cst_7 = arith.constant 1.000000e+00 : f32
    %cst_8 = arith.constant 0.000000e+00 : f32
    %8 = vector.broadcast %cst_7 : f32 to vector<8x256xf32>
    %9 = vector.broadcast %cst_8 : f32 to vector<8x256xf32>
    %10 = arith.select %7, %8, %9 : vector<8x256xi1>, vector<8x256xf32>
    %c17_i32 = arith.constant 17 : i32
    %11 = tpu.dynamic_rotate %10 by %c17_i32 dim 1 : vector<8x256xf32>, i32 -> vector<8x256xf32>
    %c0_9 = arith.constant 0 : index
    %c0_10 = arith.constant 0 : index
    %c0_11 = arith.constant 0 : index
    %12 = vector.load %arg6[%c0_9, %c0_10, %c0_11] : memref<9x1x256xf32, #tpu.memory_space<vmem>>, vector<1x1x256xf32>
    %13 = vector.shape_cast %12 : vector<1x1x256xf32> to vector<1x256xf32>
    %14 = vector.broadcast %13 : vector<1x256xf32> to vector<8x256xf32>
    %15 = arith.mulf %11, %14 : vector<8x256xf32>
    %c0_12 = arith.constant 0 : index
    %c0_13 = arith.constant 0 : index
    %16 = vector.load %arg8[%c0_12, %c0_13] : memref<72x256xf32, #tpu.memory_space<vmem>>, vector<8x256xf32>
    tpu.vector_store %arg8[%c0_12, %c0_13], %15 {strides = array<i32>} : memref<72x256xf32, #tpu.memory_space<vmem>>, vector<8x256xf32>,
    %c16_i32 = arith.constant 16 : i32
    %17 = tpu.dynamic_rotate %10 by %c16_i32 dim 1 : vector<8x256xf32>, i32 -> vector<8x256xf32>
    %c1 = arith.constant 1 : index
    %c0_14 = arith.constant 0 : index
    %c0_15 = arith.constant 0 : index
    %18 = vector.load %arg6[%c1, %c0_14, %c0_15] : memref<9x1x256xf32, #tpu.memory_space<vmem>>, vector<1x1x256xf32>
    %19 = vector.shape_cast %18 : vector<1x1x256xf32> to vector<1x256xf32>
    %20 = vector.broadcast %19 : vector<1x256xf32> to vector<8x256xf32>
    %21 = arith.mulf %17, %20 : vector<8x256xf32>
    %c8 = arith.constant 8 : index
    %c0_16 = arith.constant 0 : index
    %22 = vector.load %arg8[%c8, %c0_16] : memref<72x256xf32, #tpu.memory_space<vmem>>, vector<8x256xf32>
    tpu.vector_store %arg8[%c8, %c0_16], %21 {strides = array<i32>} : memref<72x256xf32, #tpu.memory_space<vmem>>, vector<8x256xf32>,
    %c15_i32 = arith.constant 15 : i32
    %23 = tpu.dynamic_rotate %10 by %c15_i32 dim 1 : vector<8x256xf32>, i32 -> vector<8x256xf32>
    %c2 = arith.constant 2 : index
    %c0_17 = arith.constant 0 : index
    %c0_18 = arith.constant 0 : index
    %24 = vector.load %arg6[%c2, %c0_17, %c0_18] : memref<9x1x256xf32, #tpu.memory_space<vmem>>, vector<1x1x256xf32>
    %25 = vector.shape_cast %24 : vector<1x1x256xf32> to vector<1x256xf32>
    %26 = vector.broadcast %25 : vector<1x256xf32> to vector<8x256xf32>
    %27 = arith.mulf %23, %26 : vector<8x256xf32>
    %c16 = arith.constant 16 : index
    %c0_19 = arith.constant 0 : index
    %28 = vector.load %arg8[%c16, %c0_19] : memref<72x256xf32, #tpu.memory_space<vmem>>, vector<8x256xf32>
    tpu.vector_store %arg8[%c16, %c0_19], %27 {strides = array<i32>} : memref<72x256xf32, #tpu.memory_space<vmem>>, vector<8x256xf32>,
    %c1_i32 = arith.constant 1 : i32
    %29 = tpu.dynamic_rotate %10 by %c1_i32 dim 1 : vector<8x256xf32>, i32 -> vector<8x256xf32>
    %c3 = arith.constant 3 : index
    %c0_20 = arith.constant 0 : index
    %c0_21 = arith.constant 0 : index
    %30 = vector.load %arg6[%c3, %c0_20, %c0_21] : memref<9x1x256xf32, #tpu.memory_space<vmem>>, vector<1x1x256xf32>
    %31 = vector.shape_cast %30 : vector<1x1x256xf32> to vector<1x256xf32>
    %32 = vector.broadcast %31 : vector<1x256xf32> to vector<8x256xf32>
    %33 = arith.mulf %29, %32 : vector<8x256xf32>
    %c24 = arith.constant 24 : index
    %c0_22 = arith.constant 0 : index
    %34 = vector.load %arg8[%c24, %c0_22] : memref<72x256xf32, #tpu.memory_space<vmem>>, vector<8x256xf32>
    tpu.vector_store %arg8[%c24, %c0_22], %33 {strides = array<i32>} : memref<72x256xf32, #tpu.memory_space<vmem>>, vector<8x256xf32>,
    %c32 = arith.constant 32 : index
    %c0_23 = arith.constant 0 : index
    %35 = vector.load %arg8[%c32, %c0_23] : memref<72x256xf32, #tpu.memory_space<vmem>>, vector<8x256xf32>
    tpu.vector_store %arg8[%c32, %c0_23], %10 {strides = array<i32>} : memref<72x256xf32, #tpu.memory_space<vmem>>, vector<8x256xf32>,
    %c255_i32 = arith.constant 255 : i32
    %36 = tpu.dynamic_rotate %10 by %c255_i32 dim 1 : vector<8x256xf32>, i32 -> vector<8x256xf32>
    %c5 = arith.constant 5 : index
    %c0_24 = arith.constant 0 : index
    %c0_25 = arith.constant 0 : index
    %37 = vector.load %arg6[%c5, %c0_24, %c0_25] : memref<9x1x256xf32, #tpu.memory_space<vmem>>, vector<1x1x256xf32>
    %38 = vector.shape_cast %37 : vector<1x1x256xf32> to vector<1x256xf32>
    %39 = vector.broadcast %38 : vector<1x256xf32> to vector<8x256xf32>
    %40 = arith.mulf %36, %39 : vector<8x256xf32>
    %c40 = arith.constant 40 : index
    %c0_26 = arith.constant 0 : index
    %41 = vector.load %arg8[%c40, %c0_26] : memref<72x256xf32, #tpu.memory_space<vmem>>, vector<8x256xf32>
    tpu.vector_store %arg8[%c40, %c0_26], %40 {strides = array<i32>} : memref<72x256xf32, #tpu.memory_space<vmem>>, vector<8x256xf32>,
    %c241_i32 = arith.constant 241 : i32
    %42 = tpu.dynamic_rotate %10 by %c241_i32 dim 1 : vector<8x256xf32>, i32 -> vector<8x256xf32>
    %c6 = arith.constant 6 : index
    %c0_27 = arith.constant 0 : index
    %c0_28 = arith.constant 0 : index
    %43 = vector.load %arg6[%c6, %c0_27, %c0_28] : memref<9x1x256xf32, #tpu.memory_space<vmem>>, vector<1x1x256xf32>
    %44 = vector.shape_cast %43 : vector<1x1x256xf32> to vector<1x256xf32>
    %45 = vector.broadcast %44 : vector<1x256xf32> to vector<8x256xf32>
    %46 = arith.mulf %42, %45 : vector<8x256xf32>
    %c48 = arith.constant 48 : index
    %c0_29 = arith.constant 0 : index
    %47 = vector.load %arg8[%c48, %c0_29] : memref<72x256xf32, #tpu.memory_space<vmem>>, vector<8x256xf32>
    tpu.vector_store %arg8[%c48, %c0_29], %46 {strides = array<i32>} : memref<72x256xf32, #tpu.memory_space<vmem>>, vector<8x256xf32>,
    %c240_i32 = arith.constant 240 : i32
    %48 = tpu.dynamic_rotate %10 by %c240_i32 dim 1 : vector<8x256xf32>, i32 -> vector<8x256xf32>
    %c7 = arith.constant 7 : index
    %c0_30 = arith.constant 0 : index
    %c0_31 = arith.constant 0 : index
    %49 = vector.load %arg6[%c7, %c0_30, %c0_31] : memref<9x1x256xf32, #tpu.memory_space<vmem>>, vector<1x1x256xf32>
    %50 = vector.shape_cast %49 : vector<1x1x256xf32> to vector<1x256xf32>
    %51 = vector.broadcast %50 : vector<1x256xf32> to vector<8x256xf32>
    %52 = arith.mulf %48, %51 : vector<8x256xf32>
    %c56 = arith.constant 56 : index
    %c0_32 = arith.constant 0 : index
    %53 = vector.load %arg8[%c56, %c0_32] : memref<72x256xf32, #tpu.memory_space<vmem>>, vector<8x256xf32>
    tpu.vector_store %arg8[%c56, %c0_32], %52 {strides = array<i32>} : memref<72x256xf32, #tpu.memory_space<vmem>>, vector<8x256xf32>,
    %c239_i32 = arith.constant 239 : i32
    %54 = tpu.dynamic_rotate %10 by %c239_i32 dim 1 : vector<8x256xf32>, i32 -> vector<8x256xf32>
    %c8_33 = arith.constant 8 : index
    %c0_34 = arith.constant 0 : index
    %c0_35 = arith.constant 0 : index
    %55 = vector.load %arg6[%c8_33, %c0_34, %c0_35] : memref<9x1x256xf32, #tpu.memory_space<vmem>>, vector<1x1x256xf32>
    %56 = vector.shape_cast %55 : vector<1x1x256xf32> to vector<1x256xf32>
    %57 = vector.broadcast %56 : vector<1x256xf32> to vector<8x256xf32>
    %58 = arith.mulf %54, %57 : vector<8x256xf32>
    %c64 = arith.constant 64 : index
    %c0_36 = arith.constant 0 : index
    %59 = vector.load %arg8[%c64, %c0_36] : memref<72x256xf32, #tpu.memory_space<vmem>>, vector<8x256xf32>
    tpu.vector_store %arg8[%c64, %c0_36], %58 {strides = array<i32>} : memref<72x256xf32, #tpu.memory_space<vmem>>, vector<8x256xf32>,
    %c0_37 = arith.constant 0 : index
    %c0_38 = arith.constant 0 : index
    %60 = vector.load %arg4[%c0_37, %c0_38] : memref<16x72xf32, #tpu.memory_space<vmem>>, vector<16x72xf32>
    %c0_39 = arith.constant 0 : index
    %c0_40 = arith.constant 0 : index
    %61 = vector.load %arg8[%c0_39, %c0_40] : memref<72x256xf32, #tpu.memory_space<vmem>>, vector<72x256xf32>
    %cst_41 = arith.constant dense<0.000000e+00> : vector<16x256xf32>
    %62 = tpu.matmul %60, %61, %cst_41 {dimension_numbers = #tpu.dot_dimension_numbers<[1], [0], [0], [1], [0, 0, 1, 1], [], []>} : vector<16x72xf32>, vector<72x256xf32>, vector<16x256xf32> -> vector<16x256xf32>
    %c0_42 = arith.constant 0 : index
    %c0_43 = arith.constant 0 : index
    %63 = vector.load %arg5[%c0_42, %c0_43] : memref<16x256xf32, #tpu.memory_space<vmem>>, vector<16x256xf32>
    %64 = arith.addf %62, %63 : vector<16x256xf32>
    %cst_44 = arith.constant 0.000000e+00 : f32
    %65 = vector.broadcast %cst_44 : f32 to vector<16x256xf32>
    %66 = arith.cmpf ogt, %64, %65 : vector<16x256xf32>
    %cst_45 = arith.constant 1.000000e+00 : f32
    %cst_46 = arith.constant 0.000000e+00 : f32
    %67 = vector.broadcast %cst_45 : f32 to vector<16x256xf32>
    %68 = vector.broadcast %cst_46 : f32 to vector<16x256xf32>
    %69 = arith.select %66, %67, %68 : vector<16x256xi1>, vector<16x256xf32>
    %c0_47 = arith.constant 0 : index
    %c0_48 = arith.constant 0 : index
    %c0_49 = arith.constant 0 : index
    %70 = vector.load %arg7[%c0_47, %c0_48, %c0_49] : memref<1x16x256xf32, #tpu.memory_space<vmem>>, vector<1x16x256xf32>
    %71 = vector.shape_cast %70 : vector<1x16x256xf32> to vector<16x256xf32>
    %72 = vector.shape_cast %69 : vector<16x256xf32> to vector<1x16x256xf32>
    tpu.vector_store %arg7[%c0_47, %c0_48, %c0_49], %72 {strides = array<i32>} : memref<1x16x256xf32, #tpu.memory_space<vmem>>, vector<1x16x256xf32>,
    return
  }
  func.func @transform_0(%arg0: i32) -> (i32, i32, i32) {
    %c0_i32 = arith.constant 0 : i32
    %c0_i32_0 = arith.constant 0 : i32
    %c0_i32_1 = arith.constant 0 : i32
    return %arg0, %c0_i32, %c0_i32_0 : i32, i32, i32
  }
  func.func @transform_1(%arg0: i32) -> (i32, i32) {
    %c0_i32 = arith.constant 0 : i32
    %c0_i32_0 = arith.constant 0 : i32
    %c0_i32_1 = arith.constant 0 : i32
    return %c0_i32, %c0_i32_0 : i32, i32
  }
  func.func @transform_2(%arg0: i32) -> (i32, i32) {
    %c0_i32 = arith.constant 0 : i32
    %c0_i32_0 = arith.constant 0 : i32
    %c0_i32_1 = arith.constant 0 : i32
    return %c0_i32, %c0_i32_0 : i32, i32
  }
  func.func @transform_3(%arg0: i32) -> (i32, i32) {
    %c0_i32 = arith.constant 0 : i32
    %c0_i32_0 = arith.constant 0 : i32
    %c0_i32_1 = arith.constant 0 : i32
    return %c0_i32, %c0_i32_0 : i32, i32
  }
  func.func @transform_4(%arg0: i32) -> (i32, i32) {
    %c0_i32 = arith.constant 0 : i32
    %c0_i32_0 = arith.constant 0 : i32
    %c0_i32_1 = arith.constant 0 : i32
    return %c0_i32, %c0_i32_0 : i32, i32
  }
  func.func @transform_5(%arg0: i32) -> (i32, i32, i32) {
    %c0_i32 = arith.constant 0 : i32
    %c0_i32_0 = arith.constant 0 : i32
    %c0_i32_1 = arith.constant 0 : i32
    %c0_i32_2 = arith.constant 0 : i32
    return %c0_i32, %c0_i32_0, %c0_i32_1 : i32, i32, i32
  }
  func.func @transform_6(%arg0: i32) -> (i32, i32, i32) {
    %c0_i32 = arith.constant 0 : i32
    %c0_i32_0 = arith.constant 0 : i32
    %c0_i32_1 = arith.constant 0 : i32
    return %arg0, %c0_i32, %c0_i32_0 : i32, i32, i32
  }
}

</mosaic_0001>

<llo_original>
// kernel: tpu_custom_call.1
$region0: #{tpu_custom_call.1}
  #allocation0 [shape = 'u32[]', space=smem, size = 0x4, offset = 0x4, fixed_abs, tag = 'smem constant byte address 0x4 - core index']
  #allocation1 [shape = 'u32[144,128]{1,0:T(1,128)}', space=vmem, size = 0x12000, scoped, tag = 'internal scratch']
  #allocation2 [shape = 'f32[72,256]{1,0:T(8,128)}', space=vmem, size = 0x12000, scoped, tag = 'scratch operand']
  %s0 = inlined_call_operand.hbm [shape: f32[2,4,256], index: 0, kind: input, shape index: {}]
  %s1 = inlined_call_operand.vmem [shape: f32[8,4], index: 1, kind: input, shape index: {}]
  %s2 = inlined_call_operand.hbm [shape: f32[8,256], index: 2, kind: input, shape index: {}]
  %s3 = inlined_call_operand.hbm [shape: f32[16,72], index: 3, kind: input, shape index: {}]
  %s4 = inlined_call_operand.hbm [shape: f32[16,256], index: 4, kind: input, shape index: {}]
  %s5 = inlined_call_operand.vmem [shape: f32[9,1,256], index: 5, kind: input, shape index: {}]
  %s6 = inlined_call_operand.hbm [shape: f32[2,16,256], index: 6, kind: output, shape index: {}]
  %s7 = sld [smem:[#allocation0]]
  $region73: #{tpu_custom_call.1} parent=0
    _
  %s9 = ssub.s32 1, %s7
  %s10 = scalar_select 0, %s9, %s7
  $region1: #{tpu_custom_call.1} parent=0
    #allocation3 [shape = 'u8[8192]{0}', space=vmem, size = 0x2000, scoped, tag = 'input window, operand 0']
    #allocation4 [shape = 's32[2]{0}', space=sflag, size = 0x8, scoped, tag = 'scoped memory for tpu_custom_call.1']
    #allocation5 [shape = 's32[2]{0}', space=sflag, size = 0x8, scoped, tag = 'scoped memory for tpu_custom_call.1']
    #allocation6 [shape = 'u8[8192]{0}', space=vmem, size = 0x2000, scoped, tag = 'input window, operand 2, single buffered']
    #allocation7 [shape = 's32[1]{0}', space=sflag, size = 0x4, scoped, tag = 'scoped memory for tpu_custom_call.1']
    #allocation8 [shape = 'u8[8192]{0}', space=vmem, size = 0x2000, scoped, tag = 'input window, operand 3, single buffered']
    #allocation9 [shape = 'u8[16384]{0}', space=vmem, size = 0x4000, scoped, tag = 'input window, operand 4, single buffered']
    #allocation10 [shape = 's32[1]{0}', space=sflag, size = 0x4, scoped, tag = 'scoped memory for tpu_custom_call.1']
    #allocation11 [shape = 'u8[32768]{0}', space=vmem, size = 0x8000, scoped, tag = 'output window, operand 0']
    %11 = vsyncpa [#allocation4], 0
    %s12 = scalar_lea.sflag [#allocation4], 1
    %13 = vsyncpa %s12, 0
    %14 = vsyncpa [#allocation7], 0
    %15 = vsyncpa [#allocation10], 0
    %16 = vsyncpa [#allocation5], 0
    %s17 = scalar_lea.sflag [#allocation5], 1
    %18 = vsyncpa %s17, 0
    loop: start=0, step=1, limit=4
    $region2: #{tpu_custom_call.1} parent=1 // loop_pre_header
      _
    $region3: #{tpu_custom_call.1} parent=1 // loop_header
      %s20 = sphi 0, %s24
      %p21 = scmp.ge.s32.totalorder %s20, 4
      %s30 = sphi 0, %s32
      %s33 = sphi 0, %s30
      %s34 = sphi 0, %s33
      %s50 = sphi 0, %s34
      %s54 = sphi 0, %s54
      %s56 = sphi 0, %s54
      %s57 = sphi 0, %s56
      %s71 = sphi 0, %s57
      %s75 = sphi 0, %s75
      %s77 = sphi 0, %s75
      %s78 = sphi 0, %s77
      %s92 = sphi 0, %s78
      %s96 = sphi 0, %s96
      %s98 = sphi 0, %s96
      %s99 = sphi 0, %s98
      %s113 = sphi 0, %s99
      %s117 = sphi 0, %s117
      %s119 = sphi 0, %s117
      %s120 = sphi 0, %s119
      %s134 = sphi 0, %s120
      %s138 = sphi 0, %s138
      %s140 = sphi 0, %s138
      %s141 = sphi 0, %s140
      %s155 = sphi 0, %s141
      %s161 = sphi 0, %s163
      %s164 = sphi 0, %s161
      %s165 = sphi 0, %s164
      %s181 = sphi 0, %s165
    $region4: #{tpu_custom_call.1} parent=1 // loop_header_branch
      %23 = sbr.rel (%p21) target = $region8
    $region5: #{tpu_custom_call.1} parent=1 // loop_body
      %s25 = ssub.s32 %s20, 1
      %s26 = ssub.s32 %s20, 2
      %s27 = sadd.s32 %s20, 1
      %s28 = ssub.s32 %s20, %s27
      %p29 = scmp.eq.s32.totalorder %s28, 0
      %s31 = sadd.s32 %s30, 1
      %s32 = scalar_select %p29, %s30, %s31
      %p35 = pneg %p29
      %p36 = scmp.eq.s32.totalorder %s20, 1
      %p37 = por %p35, %p36
      %p38 = scmp.ne.s32.totalorder %s30, %s33
      %p39 = scmp.eq.s32.totalorder %s20, 0
      %p40 = por %p38, %p39
      %p41 = scmp.ne.s32.totalorder %s30, %s33
      %p42 = scmp.eq.s32.totalorder %s25, 1
      %p43 = por %p41, %p42
      %p44 = scmp.ne.s32.totalorder %s33, %s34
      %p45 = scmp.eq.s32.totalorder %s25, 0
      %p46 = por %p44, %p45
      %p47 = scmp.ne.s32.totalorder %s33, %s34
      %p48 = scmp.eq.s32.totalorder %s26, 1
      %p49 = por %p47, %p48
      %p51 = scmp.ne.s32.totalorder %s34, %s50
      %p52 = scmp.eq.s32.totalorder %s26, 0
      %p53 = por %p51, %p52
      %s55 = sadd.s32 %s54, 1
      %p58 = scmp.eq.s32.totalorder %s20, 1
      %p59 = scmp.ne.s32.totalorder %s54, %s56
      %p60 = scmp.eq.s32.totalorder %s20, 0
      %p61 = por %p59, %p60
      %p62 = scmp.ne.s32.totalorder %s54, %s56
      %p63 = scmp.eq.s32.totalorder %s25, 1
      %p64 = por %p62, %p63
      %p65 = scmp.ne.s32.totalorder %s56, %s57
      %p66 = scmp.eq.s32.totalorder %s25, 0
      %p67 = por %p65, %p66
      %p68 = scmp.ne.s32.totalorder %s56, %s57
      %p69 = scmp.eq.s32.totalorder %s26, 1
      %p70 = por %p68, %p69
      %p72 = scmp.ne.s32.totalorder %s57, %s71
      %p73 = scmp.eq.s32.totalorder %s26, 0
      %p74 = por %p72, %p73
      %s76 = sadd.s32 %s75, 1
      %p79 = scmp.eq.s32.totalorder %s20, 1
      %p80 = scmp.ne.s32.totalorder %s75, %s77
      %p81 = scmp.eq.s32.totalorder %s20, 0
      %p82 = por %p80, %p81
      %p83 = scmp.ne.s32.totalorder %s75, %s77
      %p84 = scmp.eq.s32.totalorder %s25, 1
      %p85 = por %p83, %p84
      %p86 = scmp.ne.s32.totalorder %s77, %s78
      %p87 = scmp.eq.s32.totalorder %s25, 0
      %p88 = por %p86, %p87
      %p89 = scmp.ne.s32.totalorder %s77, %s78
      %p90 = scmp.eq.s32.totalorder %s26, 1
      %p91 = por %p89, %p90
      %p93 = scmp.ne.s32.totalorder %s78, %s92
      %p94 = scmp.eq.s32.totalorder %s26, 0
      %p95 = por %p93, %p94
      %s97 = sadd.s32 %s96, 1
      %p100 = scmp.eq.s32.totalorder %s20, 1
      %p101 = scmp.ne.s32.totalorder %s96, %s98
      %p102 = scmp.eq.s32.totalorder %s20, 0
      %p103 = por %p101, %p102
      %p104 = scmp.ne.s32.totalorder %s96, %s98
      %p105 = scmp.eq.s32.totalorder %s25, 1
      %p106 = por %p104, %p105
      %p107 = scmp.ne.s32.totalorder %s98, %s99
      %p108 = scmp.eq.s32.totalorder %s25, 0
      %p109 = por %p107, %p108
      %p110 = scmp.ne.s32.totalorder %s98, %s99
      %p111 = scmp.eq.s32.totalorder %s26, 1
      %p112 = por %p110, %p111
      %p114 = scmp.ne.s32.totalorder %s99, %s113
      %p115 = scmp.eq.s32.totalorder %s26, 0
      %p116 = por %p114, %p115
      %s118 = sadd.s32 %s117, 1
      %p121 = scmp.eq.s32.totalorder %s20, 1
      %p122 = scmp.ne.s32.totalorder %s117, %s119
      %p123 = scmp.eq.s32.totalorder %s20, 0
      %p124 = por %p122, %p123
      %p125 = scmp.ne.s32.totalorder %s117, %s119
      %p126 = scmp.eq.s32.totalorder %s25, 1
      %p127 = por %p125, %p126
      %p128 = scmp.ne.s32.totalorder %s119, %s120
      %p129 = scmp.eq.s32.totalorder %s25, 0
      %p130 = por %p128, %p129
      %p131 = scmp.ne.s32.totalorder %s119, %s120
      %p132 = scmp.eq.s32.totalorder %s26, 1
      %p133 = por %p131, %p132
      %p135 = scmp.ne.s32.totalorder %s120, %s134
      %p136 = scmp.eq.s32.totalorder %s26, 0
      %p137 = por %p135, %p136
      %s139 = sadd.s32 %s138, 1
      %p142 = scmp.eq.s32.totalorder %s20, 1
      %p143 = scmp.ne.s32.totalorder %s138, %s140
      %p144 = scmp.eq.s32.totalorder %s20, 0
      %p145 = por %p143, %p144
      %p146 = scmp.ne.s32.totalorder %s138, %s140
      %p147 = scmp.eq.s32.totalorder %s25, 1
      %p148 = por %p146, %p147
      %p149 = scmp.ne.s32.totalorder %s140, %s141
      %p150 = scmp.eq.s32.totalorder %s25, 0
      %p151 = por %p149, %p150
      %p152 = scmp.ne.s32.totalorder %s140, %s141
      %p153 = scmp.eq.s32.totalorder %s26, 1
      %p154 = por %p152, %p153
      %p156 = scmp.ne.s32.totalorder %s141, %s155
      %p157 = scmp.eq.s32.totalorder %s26, 0
      %p158 = por %p156, %p157
      %s159 = ssub.s32 %s20, %s27
      %p160 = scmp.eq.s32.totalorder %s159, 0
      %s162 = sadd.s32 %s161, 1
      %s163 = scalar_select %p160, %s161, %s162
      %p166 = pneg %p160
      %p167 = scmp.eq.s32.totalorder %s20, 1
      %p168 = por %p166, %p167
      %p169 = scmp.ne.s32.totalorder %s161, %s164
      %p170 = scmp.eq.s32.totalorder %s20, 0
      %p171 = por %p169, %p170
      %p172 = scmp.ne.s32.totalorder %s161, %s164
      %p173 = scmp.eq.s32.totalorder %s25, 1
      %p174 = por %p172, %p173
      %p175 = scmp.ne.s32.totalorder %s164, %s165
      %p176 = scmp.eq.s32.totalorder %s25, 0
      %p177 = por %p175, %p176
      %p178 = scmp.ne.s32.totalorder %s164, %s165
      %p179 = scmp.eq.s32.totalorder %s26, 1
      %p180 = por %p178, %p179
      %p182 = scmp.ne.s32.totalorder %s165, %s181
      %p183 = scmp.eq.s32.totalorder %s26, 0
      %p184 = por %p182, %p183
      %p185 = scmp.le.s32.totalorder 1, %s20
      %p186 = scmp.lt.s32.totalorder %s20, 3
      %p187 = pnand %p185, %p186
      %p188 = pneg %p187
      // Predicated region
      $region9: #{tpu_custom_call.1} parent=5 // pred_check
        _
      $region10: #{tpu_custom_call.1} parent=5 // pred_check_branch
        %190 = sbr.rel (%p187) target = $region12
      $region11: #{tpu_custom_call.1} parent=5 // pred_region
        %s191 = ssub.s32 %s20, 1
        // Predicated region
        $region13: #{tpu_custom_call.1} parent=11 // pred_check
          %p192 = pneg %p67
        $region14: #{tpu_custom_call.1} parent=11 // pred_check_branch
          %194 = sbr.rel (%p192) target = $region16
        $region15: #{tpu_custom_call.1} parent=11 // pred_region
          _
        $region16: #{tpu_custom_call.1} parent=11 // pred_fallthru
          _
        // Predicated region
        $region17: #{tpu_custom_call.1} parent=11 // pred_check
          %p195 = pneg %p88
        $region18: #{tpu_custom_call.1} parent=11 // pred_check_branch
          %197 = sbr.rel (%p195) target = $region20
        $region19: #{tpu_custom_call.1} parent=11 // pred_region
          %s199 = ssub.s32 256, 256
          %200 = vsyncadd [#allocation7], %s199
          %s202 = sshll.u32 [#allocation6], 4
          %s203 = int_to_ptr.vmem [resolvable:$true] %s202
          %205 = dma.hbm_to_vmem [thread:$0]  %s2, 256, %s203, [#allocation7]
        $region20: #{tpu_custom_call.1} parent=11 // pred_fallthru
          _
        // Predicated region
        $region21: #{tpu_custom_call.1} parent=11 // pred_check
          %p206 = pneg %p109
        $region22: #{tpu_custom_call.1} parent=11 // pred_check_branch
          %208 = sbr.rel (%p206) target = $region24
        $region23: #{tpu_custom_call.1} parent=11 // pred_region
          %s210 = ssub.s32 256, 256
          %211 = vsyncadd [#allocation7], %s210
          %s212 = sshll.u32 [#allocation8], 4
          %s213 = int_to_ptr.vmem [resolvable:$true] %s212
          %218 = dma.hbm_to_vmem [thread:$0]  %s3, 256, %s213, [#allocation7], 128, 128, 8
        $region24: #{tpu_custom_call.1} parent=11 // pred_fallthru
          _
        // Predicated region
        $region25: #{tpu_custom_call.1} parent=11 // pred_check
          %p219 = pneg %p130
        $region26: #{tpu_custom_call.1} parent=11 // pred_check_branch
          %221 = sbr.rel (%p219) target = $region28
        $region27: #{tpu_custom_call.1} parent=11 // pred_region
          %s223 = ssub.s32 512, 512
          %224 = vsyncadd [#allocation10], %s223
          %s225 = sshll.u32 [#allocation9], 4
          %s226 = int_to_ptr.vmem [resolvable:$true] %s225
          %231 = dma.hbm_to_vmem [thread:$0]  %s4, 512, %s226, [#allocation10], 256, 256, 16
        $region28: #{tpu_custom_call.1} parent=11 // pred_fallthru
          _
        // Predicated region
        $region29: #{tpu_custom_call.1} parent=11 // pred_check
          %p232 = pneg %p151
        $region30: #{tpu_custom_call.1} parent=11 // pred_check_branch
          %234 = sbr.rel (%p232) target = $region32
        $region31: #{tpu_custom_call.1} parent=11 // pred_region
          _
        $region32: #{tpu_custom_call.1} parent=11 // pred_fallthru
          _
      $region12: #{tpu_custom_call.1} parent=5 // pred_fallthru
        _
      %p235 = scmp.lt.s32.totalorder %s20, 2
      // Predicated region
      $region33: #{tpu_custom_call.1} parent=5 // pred_check
        %p236 = pneg %p235
      $region34: #{tpu_custom_call.1} parent=5 // pred_check_branch
        %238 = sbr.rel (%p236) target = $region36
      $region35: #{tpu_custom_call.1} parent=5 // pred_region
        // Predicated region
        $region37: #{tpu_custom_call.1} parent=35 // pred_check
          %p239 = pneg %p40
        $region38: #{tpu_custom_call.1} parent=35 // pred_check_branch
          %241 = sbr.rel (%p239) target = $region40
        $region39: #{tpu_custom_call.1} parent=35 // pred_region
          %s242 = sand.u32 %s30, 1
          %s243 = scalar_lea.sflag [#allocation4], %s242
          %s244 = sand.u32 %s30, 1
          %s245 = smul.addr %s244, 8
          %s246 = scalar_lea.vmem [#allocation3], %s245
          %s248 = ssub.s32 128, 128
          %249 = vsyncadd %s243, %s248
          %s250 = smul.addr %s20, 2
          %s251 = smul.addr %s250, 64
          %s252 = scalar_lea.hbm %s0, %s251
          %s254 = sshll.u32 %s246, 4
          %s255 = int_to_ptr.vmem [resolvable:$true] %s254
          %257 = dma.hbm_to_vmem [thread:$0]  %s252, 128, %s255, %s243
        $region40: #{tpu_custom_call.1} parent=35 // pred_fallthru
          _
      $region36: #{tpu_custom_call.1} parent=5 // pred_fallthru
        _
      %p258 = scmp.le.s32.totalorder 1, %s20
      %p259 = scmp.lt.s32.totalorder %s20, 3
      %p260 = pnand %p258, %p259
      %p261 = pneg %p260
      // Predicated region
      $region41: #{tpu_custom_call.1} parent=5 // pred_check
        _
      $region42: #{tpu_custom_call.1} parent=5 // pred_check_branch
        %263 = sbr.rel (%p260) target = $region44
      $region43: #{tpu_custom_call.1} parent=5 // pred_region
        %s264 = ssub.s32 %s20, 1
        %s265 = sand.u32 %s33, 1
        %s266 = scalar_lea.sflag [#allocation4], %s265
        %s267 = sand.u32 %s33, 1
        %s268 = smul.addr %s267, 8
        %s269 = scalar_lea.vmem [#allocation3], %s268
        // Predicated region
        $region45: #{tpu_custom_call.1} parent=43 // pred_check
          %p270 = pneg %p46
        $region46: #{tpu_custom_call.1} parent=43 // pred_check_branch
          %272 = sbr.rel (%p270) target = $region48
        $region47: #{tpu_custom_call.1} parent=43 // pred_region
          %273 = dma.done %s266, 128
        $region48: #{tpu_custom_call.1} parent=43 // pred_fallthru
          _
        // Predicated region
        $region49: #{tpu_custom_call.1} parent=43 // pred_check
          %p274 = pneg %p88
        $region50: #{tpu_custom_call.1} parent=43 // pred_check_branch
          %276 = sbr.rel (%p274) target = $region52
        $region51: #{tpu_custom_call.1} parent=43 // pred_region
          %277 = dma.done [#allocation7], 256
        $region52: #{tpu_custom_call.1} parent=43 // pred_fallthru
          _
        // Predicated region
        $region53: #{tpu_custom_call.1} parent=43 // pred_check
          %p278 = pneg %p109
        $region54: #{tpu_custom_call.1} parent=43 // pred_check_branch
          %280 = sbr.rel (%p278) target = $region56
        $region55: #{tpu_custom_call.1} parent=43 // pred_region
          %281 = dma.done [#allocation7], 256
        $region56: #{tpu_custom_call.1} parent=43 // pred_fallthru
          _
        // Predicated region
        $region57: #{tpu_custom_call.1} parent=43 // pred_check
          %p282 = pneg %p130
        $region58: #{tpu_custom_call.1} parent=43 // pred_check_branch
          %284 = sbr.rel (%p282) target = $region60
        $region59: #{tpu_custom_call.1} parent=43 // pred_region
          %285 = dma.done [#allocation10], 512
        $region60: #{tpu_custom_call.1} parent=43 // pred_fallthru
          _
        %s286 = sand.u32 %s33, 1
        %s287 = scalar_lea.sflag [#allocation4], %s286
        %s288 = sand.u32 %s33, 1
        %s289 = smul.addr %s288, 8
        %s290 = scalar_lea.vmem [#allocation3], %s289
        %p291 = pneg %p46
        %p292 = pneg %p43
        %p293 = pneg %p67
        %p294 = pneg %p64
        %p295 = pneg %p88
        %p296 = pneg %p85
        %p297 = pneg %p109
        %p298 = pneg %p106
        %p299 = pneg %p130
        %p300 = pneg %p127
        %p301 = pneg %p151
        %p302 = pneg %p148
        %p303 = pneg %p177
        %p304 = pneg %p174
        %s305 = sand.u32 %s164, 1
        %s306 = scalar_lea.sflag [#allocation5], %s305
        %s307 = sand.u32 %s164, 1
        %s308 = smul.addr %s307, 32
        %s309 = scalar_lea.vmem [#allocation11], %s308
        %v310 = vld [vmem:[%s1] sm:$0xff]
        %v311 = vld [vmem:[%s269] sm:$0xff]
        %v312 = vld [vmem:[#allocation6] sm:$0xff]
        %v313 = vld [vmem:[#allocation6 + $0x8] sm:$0xff]
        %v315 = vcombine.high %v311, %v311
        %vm316 = vcmask 31744
        %v318 = vsel %vm316, %v310, 0
        %vm320 = vcmask 1043456
        %v321 = vsel %vm320, %v311, 0
        %v323 = vsel %vm320, %v315, 0
        %325 = vmatprep.subr.mxu0 0.0
        %326 = vmatpush1.msra.mxu0 0.0
        %327 = vmatprep.subr.mxu0 0.0
        %328 = vmatpush1.msra.mxu0 0.0
        %329 = vmatprep.subr.mxu0 0.0
        %330 = vmatpush1.msra.mxu0 0.0
        %331 = vmatprep.subr.mxu0 0.0
        %332 = vmatpush1.msra.mxu0 0.0
        %333 = vmatprep.subr.mxu0 0.0
        %334 = vmatpush1.msra.mxu0 0.0
        %335 = vmatprep.subr.mxu0 0.0
        %336 = vmatpush1.msra.mxu0 0.0
        %337 = vmatprep.subr.mxu0 0.0
        %338 = vmatpush1.msra.mxu0 0.0
        %339 = vmatprep.subr.mxu0 0.0
        %340 = vmatpush1.msra.mxu0 0.0
        %341 = vmatprep.subr.mxu0 0.0
        %342 = vmatpush1.msra.mxu0 0.0
        %343 = vmatprep.subr.mxu0 0.0
        %344 = vmatpush1.msra.mxu0 0.0
        %345 = vmatprep.subr.mxu0 0.0
        %346 = vmatpush1.msra.mxu0 0.0
        %347 = vmatprep.subr.mxu0 0.0
        %348 = vmatpush1.msra.mxu0 0.0
        %349 = vmatprep.subr.mxu0 0.0
        %350 = vmatpush1.msra.mxu0 0.0
        %351 = vmatprep.subr.mxu0 0.0
        %352 = vmatpush1.msra.mxu0 0.0
        %353 = vmatprep.subr.mxu0 0.0
        %354 = vmatpush1.msra.mxu0 0.0
        %355 = vmatprep.subr.mxu0 %v323
        %356 = vmatpush1.msra.mxu0 %v321
        %357 = vmatprep.subr.mxu0 0.0
        %358 = vmatpush2.msra.mxu0 0.0
        %359 = vmatprep.subr.mxu0 0.0
        %360 = vmatpush2.msra.mxu0 0.0
        %361 = vmatprep.subr.mxu0 0.0
        %362 = vmatpush2.msra.mxu0 0.0
        %363 = vmatprep.subr.mxu0 0.0
        %364 = vmatpush2.msra.mxu0 0.0
        %365 = vmatprep.subr.mxu0 0.0
        %366 = vmatpush2.msra.mxu0 0.0
        %367 = vmatprep.subr.mxu0 0.0
        %368 = vmatpush2.msra.mxu0 0.0
        %369 = vmatprep.subr.mxu0 0.0
        %370 = vmatpush2.msra.mxu0 0.0
        %371 = vmatprep.subr.mxu0 0.0
        %372 = vmatpush2.msra.mxu0 0.0
        %373 = vmatprep.subr.mxu0 0.0
        %374 = vmatpush2.msra.mxu0 0.0
        %375 = vmatprep.subr.mxu0 0.0
        %376 = vmatpush2.msra.mxu0 0.0
        %377 = vmatprep.subr.mxu0 0.0
        %378 = vmatpush2.msra.mxu0 0.0
        %379 = vmatprep.subr.mxu0 0.0
        %380 = vmatpush2.msra.mxu0 0.0
        %381 = vmatprep.subr.mxu0 0.0
        %382 = vmatpush2.msra.mxu0 0.0
        %383 = vmatprep.subr.mxu0 0.0
        %384 = vmatpush2.msra.mxu0 0.0
        %385 = vmatprep.subr.mxu0 0.0
        %386 = vmatpush2.msra.mxu0 0.0
        %387 = vmatprep.subr.mxu0 0.0
        %388 = vmatpush2.msra.mxu0 0.0
        %389 = vmatprep.mubr.f32.mxu0 0.0
        %390 = vmatmul.mubr.f32.gmra.mxu0 %v318
        %v391 = vpop.f32.mrf.mxu0
        %v392 = vadd.f32 %v312, %v391
        %v393 = vpop.f32.mrf.mxu0
        %v394 = vadd.f32 %v313, %v393
        %395 = vdwg.mxu0
        %vm396 = vcmp.gt.f32.partialorder %v392, 0.0
        %vm397 = vcmp.gt.f32.partialorder %v394, 0.0
        %v398 = vsel %vm396, 1.0, 0.0
        %v399 = vsel %vm397, 1.0, 0.0
        %400 = vrot.lane.b32.xlu0 %v398, 17
        %v401 = vpop.permute.xlu0 %400
        %402 = vrot.lane.b32.xlu0 %v399, 17
        %v403 = vpop.permute.xlu0 %402
        %v404 = vlaneseq
        %v405 = vand.u32 %v404, 127
        %vm406 = vcmp.lt.s32.totalorder %v405, 17
        %v407 = vsel %vm406, %v401, %v403
        %v408 = vsel %vm406, %v403, %v401
        %v409 = vld [vmem:[%s5] sm:$0x3]
        %v411 = vlaneseq
        %v412 = vshrl.u32 %v411, 7
        %v413 = vsub.s32 0, %v412
        %v414 = vrot.slane %v409, %v413
        %v415 = vlaneseq
        %v416 = vshrl.u32 %v415, 7
        %v417 = vsub.s32 1, %v416
        %v418 = vrot.slane %v409, %v417
        %v421 = vmul.f32 %v408, %v414
        %v422 = vmul.f32 %v407, %v418
        %423 = vst [vmem:[#allocation2] sm:$0xff] %v421
        %424 = vst [vmem:[#allocation2 + $0x8] sm:$0xff] %v422
        %425 = vrot.lane.b32.xlu0 %v398, 16
        %v426 = vpop.permute.xlu0 %425
        %427 = vrot.lane.b32.xlu0 %v399, 16
        %v428 = vpop.permute.xlu0 %427
        %vm429 = vcmp.lt.s32.totalorder %v405, 16
        %v430 = vsel %vm429, %v426, %v428
        %v431 = vsel %vm429, %v428, %v426
        %s432 = scalar_lea.vmem %s5, 2
        %v433 = vld [vmem:[%s432] sm:$0x3]
        %v435 = vlaneseq
        %v436 = vshrl.u32 %v435, 7
        %v437 = vsub.s32 0, %v436
        %v438 = vrot.slane %v433, %v437
        %v439 = vlaneseq
        %v440 = vshrl.u32 %v439, 7
        %v441 = vsub.s32 1, %v440
        %v442 = vrot.slane %v433, %v441
        %v445 = vmul.f32 %v431, %v438
        %v446 = vmul.f32 %v430, %v442
        %447 = vst [vmem:[#allocation2 + $0x10] sm:$0xff] %v445
        %448 = vst [vmem:[#allocation2 + $0x18] sm:$0xff] %v446
        %449 = vrot.lane.b32.xlu0 %v398, 15
        %v450 = vpop.permute.xlu0 %449
        %451 = vrot.lane.b32.xlu0 %v399, 15
        %v452 = vpop.permute.xlu0 %451
        %vm453 = vcmp.lt.s32.totalorder %v405, 15
        %v454 = vsel %vm453, %v450, %v452
        %v455 = vsel %vm453, %v452, %v450
        %s456 = scalar_lea.vmem %s5, 4
        %v457 = vld [vmem:[%s456] sm:$0x3]
        %v459 = vlaneseq
        %v460 = vshrl.u32 %v459, 7
        %v461 = vsub.s32 0, %v460
        %v462 = vrot.slane %v457, %v461
        %v463 = vlaneseq
        %v464 = vshrl.u32 %v463, 7
        %v465 = vsub.s32 1, %v464
        %v466 = vrot.slane %v457, %v465
        %v469 = vmul.f32 %v455, %v462
        %v470 = vmul.f32 %v454, %v466
        %471 = vst [vmem:[#allocation2 + $0x20] sm:$0xff] %v469
        %472 = vst [vmem:[#allocation2 + $0x28] sm:$0xff] %v470
        %473 = vrot.lane.b32.xlu0 %v398, 1
        %v474 = vpop.permute.xlu0 %473
        %475 = vrot.lane.b32.xlu0 %v399, 1
        %v476 = vpop.permute.xlu0 %475
        %vm477 = vcmp.lt.s32.totalorder %v405, 1
        %v478 = vsel %vm477, %v474, %v476
        %v479 = vsel %vm477, %v476, %v474
        %s480 = scalar_lea.vmem %s5, 6
        %v481 = vld [vmem:[%s480] sm:$0x3]
        %v483 = vlaneseq
        %v484 = vshrl.u32 %v483, 7
        %v485 = vsub.s32 0, %v484
        %v486 = vrot.slane %v481, %v485
        %v487 = vlaneseq
        %v488 = vshrl.u32 %v487, 7
        %v489 = vsub.s32 1, %v488
        %v490 = vrot.slane %v481, %v489
        %v493 = vmul.f32 %v479, %v486
        %v494 = vmul.f32 %v478, %v490
        %495 = vst [vmem:[#allocation2 + $0x30] sm:$0xff] %v493
        %496 = vst [vmem:[#allocation2 + $0x38] sm:$0xff] %v494
        %497 = vst [vmem:[#allocation2 + $0x40] sm:$0xff] %v398
        %498 = vst [vmem:[#allocation2 + $0x48] sm:$0xff] %v399
        %499 = vrot.lane.b32.xlu0 %v398, 127
        %v500 = vpop.permute.xlu0 %499
        %501 = vrot.lane.b32.xlu0 %v399, 127
        %v502 = vpop.permute.xlu0 %501
        %vm503 = vcmp.lt.s32.totalorder %v405, 127
        %v504 = vsel %vm503, %v500, %v502
        %v505 = vsel %vm503, %v502, %v500
        %s506 = scalar_lea.vmem %s5, 10
        %v507 = vld [vmem:[%s506] sm:$0x3]
        %v509 = vlaneseq
        %v510 = vshrl.u32 %v509, 7
        %v511 = vsub.s32 0, %v510
        %v512 = vrot.slane %v507, %v511
        %v513 = vlaneseq
        %v514 = vshrl.u32 %v513, 7
        %v515 = vsub.s32 1, %v514
        %v516 = vrot.slane %v507, %v515
        %v519 = vmul.f32 %v504, %v512
        %v520 = vmul.f32 %v505, %v516
        %521 = vst [vmem:[#allocation2 + $0x50] sm:$0xff] %v519
        %522 = vst [vmem:[#allocation2 + $0x58] sm:$0xff] %v520
        %523 = vrot.lane.b32.xlu0 %v398, 113
        %v524 = vpop.permute.xlu0 %523
        %525 = vrot.lane.b32.xlu0 %v399, 113
        %v526 = vpop.permute.xlu0 %525
        %vm527 = vcmp.lt.s32.totalorder %v405, 113
        %v528 = vsel %vm527, %v524, %v526
        %v529 = vsel %vm527, %v526, %v524
        %s530 = scalar_lea.vmem %s5, 12
        %v531 = vld [vmem:[%s530] sm:$0x3]
        %v533 = vlaneseq
        %v534 = vshrl.u32 %v533, 7
        %v535 = vsub.s32 0, %v534
        %v536 = vrot.slane %v531, %v535
        %v537 = vlaneseq
        %v538 = vshrl.u32 %v537, 7
        %v539 = vsub.s32 1, %v538
        %v540 = vrot.slane %v531, %v539
        %v543 = vmul.f32 %v528, %v536
        %v544 = vmul.f32 %v529, %v540
        %545 = vst [vmem:[#allocation2 + $0x60] sm:$0xff] %v543
        %546 = vst [vmem:[#allocation2 + $0x68] sm:$0xff] %v544
        %547 = vrot.lane.b32.xlu0 %v398, 112
        %v548 = vpop.permute.xlu0 %547
        %549 = vrot.lane.b32.xlu0 %v399, 112
        %v550 = vpop.permute.xlu0 %549
        %vm551 = vcmp.lt.s32.totalorder %v405, 112
        %v552 = vsel %vm551, %v548, %v550
        %v553 = vsel %vm551, %v550, %v548
        %s554 = scalar_lea.vmem %s5, 14
        %v555 = vld [vmem:[%s554] sm:$0x3]
        %v557 = vlaneseq
        %v558 = vshrl.u32 %v557, 7
        %v559 = vsub.s32 0, %v558
        %v560 = vrot.slane %v555, %v559
        %v561 = vlaneseq
        %v562 = vshrl.u32 %v561, 7
        %v563 = vsub.s32 1, %v562
        %v564 = vrot.slane %v555, %v563
        %v567 = vmul.f32 %v552, %v560
        %v568 = vmul.f32 %v553, %v564
        %569 = vst [vmem:[#allocation2 + $0x70] sm:$0xff] %v567
        %570 = vst [vmem:[#allocation2 + $0x78] sm:$0xff] %v568
        %571 = vrot.lane.b32.xlu0 %v398, 111
        %v572 = vpop.permute.xlu0 %571
        %573 = vrot.lane.b32.xlu0 %v399, 111
        %v574 = vpop.permute.xlu0 %573
        %vm575 = vcmp.lt.s32.totalorder %v405, 111
        %v576 = vsel %vm575, %v572, %v574
        %v577 = vsel %vm575, %v574, %v572
        %s578 = scalar_lea.vmem %s5, 16
        %v579 = vld [vmem:[%s578] sm:$0x3]
        %v581 = vlaneseq
        %v582 = vshrl.u32 %v581, 7
        %v583 = vsub.s32 0, %v582
        %v584 = vrot.slane %v579, %v583
        %v585 = vlaneseq
        %v586 = vshrl.u32 %v585, 7
        %v587 = vsub.s32 1, %v586
        %v588 = vrot.slane %v579, %v587
        %v591 = vmul.f32 %v576, %v584
        %v592 = vmul.f32 %v577, %v588
        %593 = vst [vmem:[#allocation2 + $0x80] sm:$0xff] %v591
        %594 = vst [vmem:[#allocation2 + $0x88] sm:$0xff] %v592
        %v595 = vld [vmem:[#allocation8] sm:$0xff]
        %v596 = vld [vmem:[#allocation8 + $0x8] sm:$0xff]
        %v597 = vld [vmem:[#allocation2] sm:$0xff]
        %v598 = vld [vmem:[#allocation2 + $0x8] sm:$0xff]
        %v599 = vld [vmem:[#allocation2 + $0x10] sm:$0xff]
        %v600 = vld [vmem:[#allocation2 + $0x18] sm:$0xff]
        %v601 = vld [vmem:[#allocation2 + $0x20] sm:$0xff]
        %v602 = vld [vmem:[#allocation2 + $0x28] sm:$0xff]
        %v603 = vld [vmem:[#allocation2 + $0x30] sm:$0xff]
        %v604 = vld [vmem:[#allocation2 + $0x38] sm:$0xff]
        %v605 = vld [vmem:[#allocation2 + $0x40] sm:$0xff]
        %v606 = vld [vmem:[#allocation2 + $0x48] sm:$0xff]
        %v607 = vld [vmem:[#allocation2 + $0x50] sm:$0xff]
        %v608 = vld [vmem:[#allocation2 + $0x58] sm:$0xff]
        %v609 = vld [vmem:[#allocation2 + $0x60] sm:$0xff]
        %v610 = vld [vmem:[#allocation2 + $0x68] sm:$0xff]
        %v611 = vld [vmem:[#allocation2 + $0x70] sm:$0xff]
        %v612 = vld [vmem:[#allocation2 + $0x78] sm:$0xff]
        %v613 = vld [vmem:[#allocation2 + $0x80] sm:$0xff]
        %v614 = vld [vmem:[#allocation2 + $0x88] sm:$0xff]
        %v615 = vld [vmem:[#allocation9] sm:$0xff]
        %v616 = vld [vmem:[#allocation9 + $0x8] sm:$0xff]
        %v617 = vld [vmem:[#allocation9 + $0x10] sm:$0xff]
        %v618 = vld [vmem:[#allocation9 + $0x18] sm:$0xff]
        %vm619 = vcmask 588800
        %v621 = vsel %vm619, %v595, 0
        %v624 = vsel %vm619, %v596, 0
        %626 = vmatprep.subr.mxu0 0.0
        %627 = vmatpush1.msra.mxu0 0.0
        %628 = vmatprep.subr.mxu0 0.0
        %629 = vmatpush1.msra.mxu0 0.0
        %630 = vmatprep.subr.mxu0 0.0
        %631 = vmatpush1.msra.mxu0 0.0
        %632 = vmatprep.subr.mxu0 0.0
        %633 = vmatpush1.msra.mxu0 0.0
        %634 = vmatprep.subr.mxu0 0.0
        %635 = vmatpush1.msra.mxu0 0.0
        %636 = vmatprep.subr.mxu0 0.0
        %637 = vmatpush1.msra.mxu0 0.0
        %638 = vmatprep.subr.mxu0 0.0
        %639 = vmatpush1.msra.mxu0 0.0
        %640 = vmatprep.subr.mxu0 %v614
        %641 = vmatpush1.msra.mxu0 %v613
        %642 = vmatprep.subr.mxu0 %v612
        %643 = vmatpush1.msra.mxu0 %v611
        %644 = vmatprep.subr.mxu0 %v610
        %645 = vmatpush1.msra.mxu0 %v609
        %646 = vmatprep.subr.mxu0 %v608
        %647 = vmatpush1.msra.mxu0 %v607
        %648 = vmatprep.subr.mxu0 %v606
        %649 = vmatpush1.msra.mxu0 %v605
        %650 = vmatprep.subr.mxu0 %v604
        %651 = vmatpush1.msra.mxu0 %v603
        %652 = vmatprep.subr.mxu0 %v602
        %653 = vmatpush1.msra.mxu0 %v601
        %654 = vmatprep.subr.mxu0 %v600
        %655 = vmatpush1.msra.mxu0 %v599
        %656 = vmatprep.subr.mxu0 %v598
        %657 = vmatpush1.msra.mxu0 %v597
        %658 = vmatprep.subr.mxu0 0.0
        %659 = vmatpush2.msra.mxu0 0.0
        %660 = vmatprep.subr.mxu0 0.0
        %661 = vmatpush2.msra.mxu0 0.0
        %662 = vmatprep.subr.mxu0 0.0
        %663 = vmatpush2.msra.mxu0 0.0
        %664 = vmatprep.subr.mxu0 0.0
        %665 = vmatpush2.msra.mxu0 0.0
        %666 = vmatprep.subr.mxu0 0.0
        %667 = vmatpush2.msra.mxu0 0.0
        %668 = vmatprep.subr.mxu0 0.0
        %669 = vmatpush2.msra.mxu0 0.0
        %670 = vmatprep.subr.mxu0 0.0
        %671 = vmatpush2.msra.mxu0 0.0
        %672 = vmatprep.subr.mxu0 0.0
        %673 = vmatpush2.msra.mxu0 0.0
        %674 = vmatprep.subr.mxu0 0.0
        %675 = vmatpush2.msra.mxu0 0.0
        %676 = vmatprep.subr.mxu0 0.0
        %677 = vmatpush2.msra.mxu0 0.0
        %678 = vmatprep.subr.mxu0 0.0
        %679 = vmatpush2.msra.mxu0 0.0
        %680 = vmatprep.subr.mxu0 0.0
        %681 = vmatpush2.msra.mxu0 0.0
        %682 = vmatprep.subr.mxu0 0.0
        %683 = vmatpush2.msra.mxu0 0.0
        %684 = vmatprep.subr.mxu0 0.0
        %685 = vmatpush2.msra.mxu0 0.0
        %686 = vmatprep.subr.mxu0 0.0
        %687 = vmatpush2.msra.mxu0 0.0
        %688 = vmatprep.subr.mxu0 0.0
        %689 = vmatpush2.msra.mxu0 0.0
        %690 = vmatprep.mubr.f32.mxu0 0.0
        %691 = vmatmul.mubr.f32.gmra.mxu0 %v621
        %v692 = vpop.f32.mrf.mxu0
        %v693 = vadd.f32 %v615, %v692
        %v694 = vpop.f32.mrf.mxu0
        %v695 = vadd.f32 %v616, %v694
        %696 = vmatprep.mubr.f32.mxu0 0.0
        %697 = vmatmul.mubr.f32.gmra.mxu0 %v624
        %v698 = vpop.f32.mrf.mxu0
        %v699 = vadd.f32 %v617, %v698
        %v700 = vpop.f32.mrf.mxu0
        %v701 = vadd.f32 %v618, %v700
        %702 = vdwg.mxu0
        %vm703 = vcmp.gt.f32.partialorder %v693, 0.0
        %vm704 = vcmp.gt.f32.partialorder %v695, 0.0
        %vm705 = vcmp.gt.f32.partialorder %v699, 0.0
        %vm706 = vcmp.gt.f32.partialorder %v701, 0.0
        %v707 = vsel %vm703, 1.0, 0.0
        %v708 = vsel %vm704, 1.0, 0.0
        %v709 = vsel %vm705, 1.0, 0.0
        %v710 = vsel %vm706, 1.0, 0.0
        %711 = vst [vmem:[%s309] sm:$0xff] %v707
        %712 = vst [vmem:[%s309 + $0x8] sm:$0xff] %v708
        %713 = vst [vmem:[%s309 + $0x10] sm:$0xff] %v709
        %714 = vst [vmem:[%s309 + $0x18] sm:$0xff] %v710
        %s715 = sand.u32 %s164, 1
        %s716 = scalar_lea.sflag [#allocation5], %s715
        %s717 = sand.u32 %s164, 1
        %s718 = smul.addr %s717, 32
        %s719 = scalar_lea.vmem [#allocation11], %s718
        // Predicated region
        $region61: #{tpu_custom_call.1} parent=43 // pred_check
          %p720 = pneg %p174
        $region62: #{tpu_custom_call.1} parent=43 // pred_check_branch
          %722 = sbr.rel (%p720) target = $region64
        $region63: #{tpu_custom_call.1} parent=43 // pred_region
          %s724 = ssub.s32 512, 512
          %725 = vsyncadd %s716, %s724
          %s726 = smul.addr %s25, 4
          %s727 = smul.addr %s726, 128
          %s728 = scalar_lea.hbm %s6, %s727
          %s729 = sshll.u32 %s719, 4
          %s730 = int_to_ptr.vmem [resolvable:$true] %s729
          %735 = dma.vmem_to_hbm [thread:$0]  %s730, 512, %s728, %s716, 256, 256, 16
        $region64: #{tpu_custom_call.1} parent=43 // pred_fallthru
          _
      $region44: #{tpu_custom_call.1} parent=5 // pred_fallthru
        _
      %p736 = scmp.le.s32.totalorder 2, %s20
      // Predicated region
      $region65: #{tpu_custom_call.1} parent=5 // pred_check
        %p737 = pneg %p736
      $region66: #{tpu_custom_call.1} parent=5 // pred_check_branch
        %739 = sbr.rel (%p737) target = $region68
      $region67: #{tpu_custom_call.1} parent=5 // pred_region
        %s740 = ssub.s32 %s20, 2
        // Predicated region
        $region69: #{tpu_custom_call.1} parent=67 // pred_check
          %p741 = pneg %p180
        $region70: #{tpu_custom_call.1} parent=67 // pred_check_branch
          %743 = sbr.rel (%p741) target = $region72
        $region71: #{tpu_custom_call.1} parent=67 // pred_region
          %s744 = sand.u32 %s165, 1
          %s745 = scalar_lea.sflag [#allocation5], %s744
          %s746 = sand.u32 %s165, 1
          %s747 = smul.addr %s746, 32
          %s748 = scalar_lea.vmem [#allocation11], %s747
          %749 = dma.done %s745, 512
        $region72: #{tpu_custom_call.1} parent=67 // pred_fallthru
          _
      $region68: #{tpu_custom_call.1} parent=5 // pred_fallthru
        _
    $region6: #{tpu_custom_call.1} parent=1 // loop_footer
      %s24 = sadd.s32 1, %s20
    $region7: #{tpu_custom_call.1} parent=1 // loop_footer_branch
      %19 = sbr.rel target = $region3
    $region8: #{tpu_custom_call.1} parent=1 // loop_exit
      _
    %750 = vsyncpa [#allocation4], 1
    %s751 = scalar_lea.sflag [#allocation4], 1
    %752 = vsyncpa %s751, 1
    %753 = vsyncpa [#allocation7], 1
    %754 = vsyncpa [#allocation10], 1
    %755 = vsyncpa [#allocation5], 1
    %s756 = scalar_lea.sflag [#allocation5], 1
    %757 = vsyncpa %s756, 1

</llo_original>
